<compile_context>
chip_gen: v7x
topology: tpu7x:2x2x1
jax: 0.10.0
libtpu: 0.0.40
codegen_flags: <defaults>
</compile_context>

<pallas_src>
import functools

import jax
import jax.numpy as jnp
from jax import lax
from jax.experimental import pallas as pl
from jax.experimental.pallas import tpu as pltpu


def _round_up(n, m):
    return ((n + m - 1) // m) * m


def _gelu_exact(x):
    # nn.GELU() default: exact erf formulation.  Evaluated in f32 (erf accuracy /
    # lowering), cast back to the activation dtype afterwards.
    xf = x.astype(jnp.float32)
    y = 0.5 * xf * (1.0 + lax.erf(xf * 0.7071067811865476))
    return y.astype(x.dtype)


def _gelu_tanh(x):
    # tanh-approx GELU: the tanh goes to the EUP slot (parallel with the VALU slot),
    # cutting per-activation VALU work ~20+ ops -> ~5.  Max deviation from the exact
    # erf GELU is ~3e-3 (absolute, per activation).
    c = 0.7978845608028654  # sqrt(2/pi)
    return 0.5 * x * (1.0 + jnp.tanh(c * (x + 0.044715 * (x * x * x))))


def _mlp_kernel(xT_ref, w1_ref, b1_ref, w2_ref, b2_ref, w3_ref, b3_ref, oT_ref,
                *, gelu_fn, act_dtype):
    # xT_ref: (in_dim, bb) in the compute dtype.  No upcast: operands feed the MXU
    # directly; accumulation is f32 via preferred_element_type.
    xT = xT_ref[...]

    # Layer 1: (32, in) @ (in, bb) + (32, 1) -> GELU
    h1 = jnp.dot(w1_ref[...], xT, preferred_element_type=jnp.float32) + b1_ref[...]
    h1 = gelu_fn(h1.astype(act_dtype))

    # Layer 2: (16, 32) @ (32, bb) + (16, 1) -> GELU
    h2 = jnp.dot(w2_ref[...], h1.astype(w2_ref.dtype),
                 preferred_element_type=jnp.float32) + b2_ref[...]
    h2 = gelu_fn(h2.astype(act_dtype))

    # Layer 3: (out_pad, 16) @ (16, bb) + (out_pad, 1)   (rows padded to 8 -> unmasked vst)
    out = jnp.dot(w3_ref[...], h2.astype(w3_ref.dtype),
                  preferred_element_type=jnp.float32) + b3_ref[...]
    oT_ref[...] = out.astype(oT_ref.dtype)


def lipschitz_nn_forward_T(xT, params, *, block_batch=16384, compute_dtype=jnp.float32,
                           act_dtype=None, gelu_approx=False, out_dtype=jnp.float32):
    """Fused MLP on the transposed (lane-dense) layout.

    xT: [input_dim, B]  (batch on the lane axis).  Returns y^T: [output_dim, B].
    Prefer this entry point inside a larger jit so producer/consumer keep the
    transposed layout and no extra transpose HBM passes are emitted.

    compute_dtype: dtype of the x stream + weights fed to the MXU.  float32 = exact
        path (matches the f32 reference); bfloat16 halves the dominant HBM read and
        avoids emulated f32 MXU passes (K <= 32, f32 accumulation keeps accuracy).
    act_dtype: dtype the GELU is evaluated in (default = compute_dtype).  bf16 halves
        VALU/EUP bundles on v6e/v7x; on v5e (no bf16 VPU/EUP) pass jnp.float32.
    gelu_approx: False -> exact erf GELU (nn.GELU() semantics); True -> tanh approx
        (EUP-routed, ~2-4x less VALU work, <= ~3e-3 deviation per activation).
    """
    w1, b1, w2, b2, w3, b3 = params                       # w: (in, out), b: (1, out)
    in_dim, B = xT.shape
    out_dim = w3.shape[1]
    out_pad = _round_up(out_dim, 8)                       # full-sublane output rows
    act_dtype = compute_dtype if act_dtype is None else act_dtype

    # ---- batch tile: 512-aligned; capped so >=2 grid steps exist when the batch
    # ---- allows it (v7x: both TensorCores get work via dimension_semantics parallel).
    bb_min = 512
    bb = max(bb_min, (int(block_batch) // bb_min) * bb_min)
    if _round_up(B, bb_min) >= 2 * bb_min:
        bb = min(bb, _round_up((B + 1) // 2, bb_min))
    else:
        bb = bb_min
    grid_b = (B + bb - 1) // bb
    Bp = grid_b * bb

    # ---- operand prep: cast, pad batch columns, pad output rows ----
    xTc = xT.astype(compute_dtype)
    if Bp != B:
        xTc = jnp.pad(xTc, ((0, 0), (0, Bp - B)))
    w1t = w1.T.astype(compute_dtype)                                              # (32, in)
    w2t = w2.T.astype(compute_dtype)                                              # (16, 32)
    w3t = jnp.pad(w3.T, ((0, out_pad - out_dim), (0, 0))).astype(compute_dtype)   # (out_pad, 16)
    b1c = b1.reshape(-1, 1).astype(jnp.float32)
    b2c = b2.reshape(-1, 1).astype(jnp.float32)
    b3c = jnp.pad(b3.reshape(-1, 1), ((0, out_pad - out_dim), (0, 0))).astype(jnp.float32)

    # ---- explicit VMEM budget: double-buffered x/out tiles + f32 temporaries (w/ margin).
    # Raises v5e's 16 MiB scoped default; capped well under v7x's 64 MiB/TC physical.
    xb = jnp.dtype(compute_dtype).itemsize
    ob = jnp.dtype(out_dtype).itemsize
    est = (2 * bb * (in_dim * xb + out_pad * ob)
           + 3 * bb * (32 + 16 + out_pad) * 4
           + 2 * 4 * (in_dim * 32 + 32 * 16 + 16 * out_pad + 32 + 16 + out_pad)
           + (2 << 20))
    vmem_limit = int(min(48 << 20, max(32 << 20, est)))

    full = lambda a: pl.BlockSpec(a.shape, lambda i: (0,) * a.ndim)
    kernel = functools.partial(
        _mlp_kernel,
        gelu_fn=_gelu_tanh if gelu_approx else _gelu_exact,
        act_dtype=act_dtype,
    )

    yT = pl.pallas_call(
        kernel,
        out_shape=jax.ShapeDtypeStruct((out_pad, Bp), out_dtype),
        grid_spec=pltpu.PrefetchScalarGridSpec(
            num_scalar_prefetch=0,
            grid=(grid_b,),
            in_specs=[
                pl.BlockSpec((in_dim, bb), lambda i: (0, i)),   # x^T tile (lane-dense stream)
                full(w1t), full(b1c),                           # weights/biases resident in VMEM
                full(w2t), full(b2c),
                full(w3t), full(b3c),
            ],
            out_specs=pl.BlockSpec((out_pad, bb), lambda i: (0, i)),  # y^T tile (lane-dense, full sublanes)
        ),
        compiler_params=pltpu.CompilerParams(
            dimension_semantics=("parallel",),   # batch tiles shard across TensorCores
            vmem_limit_bytes=vmem_limit,
        ),
    )(xTc, w1t, b1c, w2t, b2c, w3t, b3c)

    return yT[:out_dim, :B]


def lipschitz_nn_forward(x, params, **kwargs):
    """Batch-major convenience wrapper: x [B, input_dim] -> y [B, output_dim].

    Standalone, the transpose/untranspose here are extra XLA HBM passes; when embedded
    in a larger jit prefer lipschitz_nn_forward_T with the transposed layout.
    """
    return lipschitz_nn_forward_T(x.T, params, **kwargs).T


def init_params(key, input_dim=12, output_dim=5):
    """Deterministic init mirroring nn.Linear's default U(-1/sqrt(fan_in), +1/sqrt(fan_in))."""
    dims = [(input_dim, 32), (32, 16), (16, output_dim)]
    params = []
    for (fan_in, fan_out) in dims:
        key, kw, kb = jax.random.split(key, 3)
        bound = 1.0 / jnp.sqrt(float(fan_in))
        w = jax.random.uniform(kw, (fan_in, fan_out), jnp.float32, -bound, bound)
        b = jax.random.uniform(kb, (1, fan_out), jnp.float32, -bound, bound)
        params += [w, b]
    return tuple(params)


def reference_forward(x, params):
    w1, b1, w2, b2, w3, b3 = params
    h1 = _gelu_exact(x @ w1 + b1)
    h2 = _gelu_exact(h1 @ w2 + b2)
    return h2 @ w3 + b3


if __name__ == "__main__":
    key = jax.random.PRNGKey(0)
    kp, kx1, kx2 = jax.random.split(key, 3)

    input_dim, output_dim = 12, 5
    params = init_params(kp, input_dim=input_dim, output_dim=output_dim)

    # Small primary case (batch=8, padded internally to one 512-wide lane tile).
    x_small = jax.random.normal(kx1, (8, input_dim), jnp.float32)
    y_ref = reference_forward(x_small, params)

    # Default (accurate) path: f32 operands + exact erf GELU -> matches nn.GELU() semantics.
    y = jax.block_until_ready(lipschitz_nn_forward(x_small, params))
    assert y.shape == (8, output_dim)
    assert jnp.allclose(y, y_ref, atol=1e-5, rtol=1e-5), "f32/exact path mismatch vs reference"

    # Fast path: bf16 operands + tanh-approx (EUP-routed) GELU; looser tolerance.
    # (On v5e pass act_dtype=jnp.float32 since it has no bf16 VPU/EUP.)
    y_fast = jax.block_until_ready(
        lipschitz_nn_forward(x_small, params,
                             compute_dtype=jnp.bfloat16, gelu_approx=True))
    assert jnp.allclose(y_fast, y_ref, atol=5e-2, rtol=5e-2), "bf16/approx path mismatch vs reference"

    # Non-multiple batch exercising padding AND a >=2-step grid (v7x dual-TC path).
    x_big = jax.random.normal(kx2, (1200, input_dim), jnp.float32)
    y_big = jax.block_until_ready(lipschitz_nn_forward(x_big, params))
    y_big_ref = reference_forward(x_big, params)
    assert y_big.shape == (1200, output_dim)
    assert jnp.allclose(y_big, y_big_ref, atol=1e-5, rtol=1e-5), "padded/tiled path mismatch"

    # TODO(synk): lip_loss (autograd Jacobian penalty) is a training-time loss, not part of
    # forward(); it is intentionally not implemented in the kernel.
    print("KERNEL_OK")
</pallas_src>

<mosaic_0001>
module attributes {stable_mosaic.version = 11 : i64} {
  func.func @_mlp_kernel(%arg0: i32, %arg1: memref<12x512xf32, #tpu.memory_space<vmem>>, %arg2: memref<32x12xf32, #tpu.memory_space<vmem>>, %arg3: memref<32x1xf32, #tpu.memory_space<vmem>>, %arg4: memref<16x32xf32, #tpu.memory_space<vmem>>, %arg5: memref<16x1xf32, #tpu.memory_space<vmem>>, %arg6: memref<8x16xf32, #tpu.memory_space<vmem>>, %arg7: memref<8x1xf32, #tpu.memory_space<vmem>>, %arg8: memref<8x512xf32, #tpu.memory_space<vmem>>) attributes {dimension_semantics = [#tpu.dimension_semantics<parallel>], iteration_bounds = array<i64: 1>, scalar_prefetch = 0 : i64, scratch_operands = 0 : i64, tpu.core_type = #tpu.core_type<tc>, window_params = [{transform_indices = @transform_0, window_bounds = array<i64: 12, 512>}, {pipeline_mode = #tpu.pipeline_mode<synchronous>, transform_indices = @transform_1, window_bounds = array<i64: 32, 12>}, {pipeline_mode = #tpu.pipeline_mode<synchronous>, transform_indices = @transform_2, window_bounds = array<i64: 32, 1>}, {pipeline_mode = #tpu.pipeline_mode<synchronous>, transform_indices = @transform_3, window_bounds = array<i64: 16, 32>}, {pipeline_mode = #tpu.pipeline_mode<synchronous>, transform_indices = @transform_4, window_bounds = array<i64: 16, 1>}, {pipeline_mode = #tpu.pipeline_mode<synchronous>, transform_indices = @transform_5, window_bounds = array<i64: 8, 16>}, {pipeline_mode = #tpu.pipeline_mode<synchronous>, transform_indices = @transform_6, window_bounds = array<i64: 8, 1>}, {transform_indices = @transform_7, window_bounds = array<i64: 8, 512>}]} {
    %c0 = arith.constant 0 : index
    %c0_0 = arith.constant 0 : index
    %0 = vector.load %arg1[%c0, %c0_0] : memref<12x512xf32, #tpu.memory_space<vmem>>, vector<12x512xf32>
    %c0_1 = arith.constant 0 : index
    %c0_2 = arith.constant 0 : index
    %1 = vector.load %arg2[%c0_1, %c0_2] : memref<32x12xf32, #tpu.memory_space<vmem>>, vector<32x12xf32>
    %cst = arith.constant dense<0.000000e+00> : vector<32x512xf32>
    %2 = tpu.matmul %1, %0, %cst {dimension_numbers = #tpu.dot_dimension_numbers<[1], [0], [0], [1], [0, 0, 1, 1], [], []>} : vector<32x12xf32>, vector<12x512xf32>, vector<32x512xf32> -> vector<32x512xf32>
    %c0_3 = arith.constant 0 : index
    %c0_4 = arith.constant 0 : index
    %3 = vector.load %arg3[%c0_3, %c0_4] : memref<32x1xf32, #tpu.memory_space<vmem>>, vector<32x1xf32>
    %4 = vector.broadcast %3 : vector<32x1xf32> to vector<32x512xf32>
    %5 = arith.addf %2, %4 : vector<32x512xf32>
    %cst_5 = arith.constant 5.000000e-01 : f32
    %6 = vector.broadcast %cst_5 : f32 to vector<32x512xf32>
    %7 = arith.mulf %6, %5 : vector<32x512xf32>
    %cst_6 = arith.constant 0.707106769 : f32
    %8 = vector.broadcast %cst_6 : f32 to vector<32x512xf32>
    %9 = arith.mulf %5, %8 : vector<32x512xf32>
    %10 = math.erf %9 : vector<32x512xf32>
    %cst_7 = arith.constant 1.000000e+00 : f32
    %11 = vector.broadcast %cst_7 : f32 to vector<32x512xf32>
    %12 = arith.addf %11, %10 : vector<32x512xf32>
    %13 = arith.mulf %7, %12 : vector<32x512xf32>
    %c0_8 = arith.constant 0 : index
    %c0_9 = arith.constant 0 : index
    %14 = vector.load %arg4[%c0_8, %c0_9] : memref<16x32xf32, #tpu.memory_space<vmem>>, vector<16x32xf32>
    %cst_10 = arith.constant dense<0.000000e+00> : vector<16x512xf32>
    %15 = tpu.matmul %14, %13, %cst_10 {dimension_numbers = #tpu.dot_dimension_numbers<[1], [0], [0], [1], [0, 0, 1, 1], [], []>} : vector<16x32xf32>, vector<32x512xf32>, vector<16x512xf32> -> vector<16x512xf32>
    %c0_11 = arith.constant 0 : index
    %c0_12 = arith.constant 0 : index
    %16 = vector.load %arg5[%c0_11, %c0_12] : memref<16x1xf32, #tpu.memory_space<vmem>>, vector<16x1xf32>
    %17 = vector.broadcast %16 : vector<16x1xf32> to vector<16x512xf32>
    %18 = arith.addf %15, %17 : vector<16x512xf32>
    %cst_13 = arith.constant 5.000000e-01 : f32
    %19 = vector.broadcast %cst_13 : f32 to vector<16x512xf32>
    %20 = arith.mulf %19, %18 : vector<16x512xf32>
    %cst_14 = arith.constant 0.707106769 : f32
    %21 = vector.broadcast %cst_14 : f32 to vector<16x512xf32>
    %22 = arith.mulf %18, %21 : vector<16x512xf32>
    %23 = math.erf %22 : vector<16x512xf32>
    %cst_15 = arith.constant 1.000000e+00 : f32
    %24 = vector.broadcast %cst_15 : f32 to vector<16x512xf32>
    %25 = arith.addf %24, %23 : vector<16x512xf32>
    %26 = arith.mulf %20, %25 : vector<16x512xf32>
    %c0_16 = arith.constant 0 : index
    %c0_17 = arith.constant 0 : index
    %27 = vector.load %arg6[%c0_16, %c0_17] : memref<8x16xf32, #tpu.memory_space<vmem>>, vector<8x16xf32>
    %cst_18 = arith.constant dense<0.000000e+00> : vector<8x512xf32>
    %28 = tpu.matmul %27, %26, %cst_18 {dimension_numbers = #tpu.dot_dimension_numbers<[1], [0], [0], [1], [0, 0, 1, 1], [], []>} : vector<8x16xf32>, vector<16x512xf32>, vector<8x512xf32> -> vector<8x512xf32>
    %c0_19 = arith.constant 0 : index
    %c0_20 = arith.constant 0 : index
    %29 = vector.load %arg7[%c0_19, %c0_20] : memref<8x1xf32, #tpu.memory_space<vmem>>, vector<8x1xf32>
    %30 = vector.broadcast %29 : vector<8x1xf32> to vector<8x512xf32>
    %31 = arith.addf %28, %30 : vector<8x512xf32>
    %c0_21 = arith.constant 0 : index
    %c0_22 = arith.constant 0 : index
    %32 = vector.load %arg8[%c0_21, %c0_22] : memref<8x512xf32, #tpu.memory_space<vmem>>, vector<8x512xf32>
    tpu.vector_store %arg8[%c0_21, %c0_22], %31 {strides = array<i32>} : memref<8x512xf32, #tpu.memory_space<vmem>>, vector<8x512xf32>,
    return
  }
  func.func @transform_0(%arg0: i32) -> (i32, i32) {
    %c0_i32 = arith.constant 0 : i32
    %c0_i32_0 = arith.constant 0 : i32
    return %c0_i32, %arg0 : i32, i32
  }
  func.func @transform_1(%arg0: i32) -> (i32, i32) {
    %c0_i32 = arith.constant 0 : i32
    %c0_i32_0 = arith.constant 0 : i32
    %c0_i32_1 = arith.constant 0 : i32
    return %c0_i32, %c0_i32_0 : i32, i32
  }
  func.func @transform_2(%arg0: i32) -> (i32, i32) {
    %c0_i32 = arith.constant 0 : i32
    %c0_i32_0 = arith.constant 0 : i32
    %c0_i32_1 = arith.constant 0 : i32
    return %c0_i32, %c0_i32_0 : i32, i32
  }
  func.func @transform_3(%arg0: i32) -> (i32, i32) {
    %c0_i32 = arith.constant 0 : i32
    %c0_i32_0 = arith.constant 0 : i32
    %c0_i32_1 = arith.constant 0 : i32
    return %c0_i32, %c0_i32_0 : i32, i32
  }
  func.func @transform_4(%arg0: i32) -> (i32, i32) {
    %c0_i32 = arith.constant 0 : i32
    %c0_i32_0 = arith.constant 0 : i32
    %c0_i32_1 = arith.constant 0 : i32
    return %c0_i32, %c0_i32_0 : i32, i32
  }
  func.func @transform_5(%arg0: i32) -> (i32, i32) {
    %c0_i32 = arith.constant 0 : i32
    %c0_i32_0 = arith.constant 0 : i32
    %c0_i32_1 = arith.constant 0 : i32
    return %c0_i32, %c0_i32_0 : i32, i32
  }
  func.func @transform_6(%arg0: i32) -> (i32, i32) {
    %c0_i32 = arith.constant 0 : i32
    %c0_i32_0 = arith.constant 0 : i32
    %c0_i32_1 = arith.constant 0 : i32
    return %c0_i32, %c0_i32_0 : i32, i32
  }
  func.func @transform_7(%arg0: i32) -> (i32, i32) {
    %c0_i32 = arith.constant 0 : i32
    %c0_i32_0 = arith.constant 0 : i32
    return %c0_i32, %arg0 : i32, i32
  }
}

</mosaic_0001>

<llo_original>
// kernel: tpu_custom_call.1
$region0: #{tpu_custom_call.1}
  #allocation0 [shape = 'u32[]', space=smem, size = 0x4, offset = 0x4, fixed_abs, tag = 'smem constant byte address 0x4 - core index']
  #allocation1 [shape = 'u32[144,128]{1,0:T(1,128)}', space=vmem, size = 0x12000, scoped, tag = 'internal scratch']
  %s0 = inlined_call_operand.vmem [shape: f32[12,512], index: 0, kind: input, shape index: {}]
  %s1 = inlined_call_operand.vmem [shape: f32[32,12], index: 1, kind: input, shape index: {}]
  %s2 = inlined_call_operand.vmem [shape: f32[32,1], index: 2, kind: input, shape index: {}]
  %s3 = inlined_call_operand.vmem [shape: f32[16,32], index: 3, kind: input, shape index: {}]
  %s4 = inlined_call_operand.vmem [shape: f32[16,1], index: 4, kind: input, shape index: {}]
  %s5 = inlined_call_operand.vmem [shape: f32[8,16], index: 5, kind: input, shape index: {}]
  %s6 = inlined_call_operand.vmem [shape: f32[8,1], index: 6, kind: input, shape index: {}]
  %s7 = inlined_call_operand.hbm [shape: f32[8,512], index: 7, kind: output, shape index: {}]
  %s8 = sld [smem:[#allocation0]]
  $region38: #{tpu_custom_call.1} parent=0
    _
  %s10 = ssub.s32 1, %s8
  %s11 = scalar_select 0, %s10, %s8
  $region1: #{tpu_custom_call.1} parent=0
    #allocation2 [shape = 'u8[16384]{0}', space=vmem, size = 0x4000, scoped, tag = 'output window, operand 0, single buffered']
    #allocation3 [shape = 's32[1]{0}', space=sflag, size = 0x4, scoped, tag = 'scoped memory for tpu_custom_call.1']
    %12 = vsyncpa [#allocation3], 0
    // Predicated region
    $region2: #{tpu_custom_call.1} parent=1 // pred_check
      _
    $region3: #{tpu_custom_call.1} parent=1 // pred_check_branch
      %14 = sbr.rel (0) target = $region5
    $region4: #{tpu_custom_call.1} parent=1 // pred_region
      _
    $region5: #{tpu_custom_call.1} parent=1 // pred_fallthru
      _
    // Predicated region
    $region6: #{tpu_custom_call.1} parent=1 // pred_check
      _
    $region7: #{tpu_custom_call.1} parent=1 // pred_check_branch
      %16 = sbr.rel (0) target = $region9
    $region8: #{tpu_custom_call.1} parent=1 // pred_region
      _
    $region9: #{tpu_custom_call.1} parent=1 // pred_fallthru
      _
    // Predicated region
    $region10: #{tpu_custom_call.1} parent=1 // pred_check
      _
    $region11: #{tpu_custom_call.1} parent=1 // pred_check_branch
      %18 = sbr.rel (0) target = $region13
    $region12: #{tpu_custom_call.1} parent=1 // pred_region
      _
    $region13: #{tpu_custom_call.1} parent=1 // pred_fallthru
      _
    // Predicated region
    $region14: #{tpu_custom_call.1} parent=1 // pred_check
      _
    $region15: #{tpu_custom_call.1} parent=1 // pred_check_branch
      %20 = sbr.rel (0) target = $region17
    $region16: #{tpu_custom_call.1} parent=1 // pred_region
      _
    $region17: #{tpu_custom_call.1} parent=1 // pred_fallthru
      _
    // Predicated region
    $region18: #{tpu_custom_call.1} parent=1 // pred_check
      _
    $region19: #{tpu_custom_call.1} parent=1 // pred_check_branch
      %22 = sbr.rel (0) target = $region21
    $region20: #{tpu_custom_call.1} parent=1 // pred_region
      _
    $region21: #{tpu_custom_call.1} parent=1 // pred_fallthru
      _
    // Predicated region
    $region22: #{tpu_custom_call.1} parent=1 // pred_check
      _
    $region23: #{tpu_custom_call.1} parent=1 // pred_check_branch
      %24 = sbr.rel (0) target = $region25
    $region24: #{tpu_custom_call.1} parent=1 // pred_region
      _
    $region25: #{tpu_custom_call.1} parent=1 // pred_fallthru
      _
    // Predicated region
    $region26: #{tpu_custom_call.1} parent=1 // pred_check
      _
    $region27: #{tpu_custom_call.1} parent=1 // pred_check_branch
      %26 = sbr.rel (0) target = $region29
    $region28: #{tpu_custom_call.1} parent=1 // pred_region
      _
    $region29: #{tpu_custom_call.1} parent=1 // pred_fallthru
      _
    %v27 = vld [vmem:[%s0] sm:$0xff]
    %v28 = vld [vmem:[%s0 + $0x8] sm:$0xff]
    %v29 = vld [vmem:[%s0 + $0x10] sm:$0xff]
    %v30 = vld [vmem:[%s0 + $0x18] sm:$0xff]
    %v31 = vld [vmem:[%s0 + $0x20] sm:$0xf]
    %v32 = vld [vmem:[%s0 + $0x28] sm:$0xf]
    %v33 = vld [vmem:[%s0 + $0x30] sm:$0xf]
    %v34 = vld [vmem:[%s0 + $0x38] sm:$0xf]
    %v35 = vld [vmem:[%s1] sm:$0xff]
    %v36 = vld [vmem:[%s1 + $0x8] sm:$0xff]
    %v37 = vld [vmem:[%s1 + $0x10] sm:$0xff]
    %v38 = vld [vmem:[%s1 + $0x18] sm:$0xff]
    %v39 = vld [vmem:[%s2] sm:$0xff]
    %v40 = vld [vmem:[%s2 + $0x8] sm:$0xff]
    %v41 = vld [vmem:[%s2 + $0x10] sm:$0xff]
    %v42 = vld [vmem:[%s2 + $0x18] sm:$0xff]
    %44 = vset.pattern.permute.xlu0 0
    %45 = vperm.xlu0 %44, %v39
    %v46 = vpop.permute.xlu0 %45
    %49 = vset.pattern.permute.xlu0 0
    %50 = vperm.xlu0 %49, %v40
    %v51 = vpop.permute.xlu0 %50
    %54 = vset.pattern.permute.xlu0 0
    %55 = vperm.xlu0 %54, %v41
    %v56 = vpop.permute.xlu0 %55
    %59 = vset.pattern.permute.xlu0 0
    %60 = vperm.xlu0 %59, %v42
    %v61 = vpop.permute.xlu0 %60
    %vm63 = vcmask 97280
    %v65 = vsel %vm63, %v35, 0
    %v68 = vsel %vm63, %v36, 0
    %v71 = vsel %vm63, %v37, 0
    %v74 = vsel %vm63, %v38, 0
    %vm76 = vcmask 1043456
    %v78 = vsel %vm76, %v31, 0
    %v81 = vsel %vm76, %v32, 0
    %v84 = vsel %vm76, %v33, 0
    %v87 = vsel %vm76, %v34, 0
    %89 = vmatprep.subr.mxu0 %v28
    %90 = vmatpush1.msra.mxu0 %v27
    %91 = vmatprep.subr.mxu0 %v81
    %92 = vmatpush1.msra.mxu0 %v78
    %93 = vmatprep.subr.mxu0 0.0
    %94 = vmatpush1.msra.mxu0 0.0
    %95 = vmatprep.subr.mxu0 0.0
    %96 = vmatpush1.msra.mxu0 0.0
    %97 = vmatprep.subr.mxu0 0.0
    %98 = vmatpush1.msra.mxu0 0.0
    %99 = vmatprep.subr.mxu0 0.0
    %100 = vmatpush1.msra.mxu0 0.0
    %101 = vmatprep.subr.mxu0 0.0
    %102 = vmatpush1.msra.mxu0 0.0
    %103 = vmatprep.subr.mxu0 0.0
    %104 = vmatpush1.msra.mxu0 0.0
    %105 = vmatprep.subr.mxu0 0.0
    %106 = vmatpush1.msra.mxu0 0.0
    %107 = vmatprep.subr.mxu0 0.0
    %108 = vmatpush1.msra.mxu0 0.0
    %109 = vmatprep.subr.mxu0 0.0
    %110 = vmatpush1.msra.mxu0 0.0
    %111 = vmatprep.subr.mxu0 0.0
    %112 = vmatpush1.msra.mxu0 0.0
    %113 = vmatprep.subr.mxu0 0.0
    %114 = vmatpush1.msra.mxu0 0.0
    %115 = vmatprep.subr.mxu0 0.0
    %116 = vmatpush1.msra.mxu0 0.0
    %117 = vmatprep.subr.mxu0 0.0
    %118 = vmatpush1.msra.mxu0 0.0
    %119 = vmatprep.subr.mxu0 0.0
    %120 = vmatpush1.msra.mxu0 0.0
    %121 = vmatprep.subr.mxu0 0.0
    %122 = vmatpush1.msra.mxu0 0.0
    %123 = vmatprep.subr.mxu0 0.0
    %124 = vmatpush1.msra.mxu0 0.0
    %125 = vmatprep.subr.mxu0 0.0
    %126 = vmatpush1.msra.mxu0 0.0
    %127 = vmatprep.subr.mxu0 0.0
    %128 = vmatpush1.msra.mxu0 0.0
    %129 = vmatprep.subr.mxu0 0.0
    %130 = vmatpush1.msra.mxu0 0.0
    %131 = vmatprep.subr.mxu0 0.0
    %132 = vmatpush1.msra.mxu0 0.0
    %133 = vmatprep.subr.mxu0 0.0
    %134 = vmatpush1.msra.mxu0 0.0
    %135 = vmatprep.subr.mxu0 0.0
    %136 = vmatpush1.msra.mxu0 0.0
    %137 = vmatprep.subr.mxu0 0.0
    %138 = vmatpush1.msra.mxu0 0.0
    %139 = vmatprep.subr.mxu0 0.0
    %140 = vmatpush1.msra.mxu0 0.0
    %141 = vmatprep.subr.mxu0 0.0
    %142 = vmatpush1.msra.mxu0 0.0
    %143 = vmatprep.subr.mxu0 0.0
    %144 = vmatpush1.msra.mxu0 0.0
    %145 = vmatprep.subr.mxu0 0.0
    %146 = vmatpush1.msra.mxu0 0.0
    %147 = vmatprep.subr.mxu0 0.0
    %148 = vmatpush1.msra.mxu0 0.0
    %149 = vmatprep.subr.mxu0 0.0
    %150 = vmatpush1.msra.mxu0 0.0
    %151 = vmatprep.subr.mxu0 0.0
    %152 = vmatpush1.msra.mxu0 0.0
    %153 = vmatprep.mubr.f32.mxu0 0.0
    %154 = vmatmul.mubr.f32.gmra.mrb[0].mxu0 %v65
    %v155 = vpop.f32.mrb[0].mxu0
    %v156 = vadd.f32 %v46, %v155
    %v157 = vpop.f32.mrb[0].mxu0
    %v158 = vadd.f32 %v46, %v157
    %159 = vmatprep.mubr.f32.mxu0 0.0
    %160 = vmatmul.mubr.f32.gmra.mrb[0].mxu0 %v68
    %v161 = vpop.f32.mrb[0].mxu0
    %v162 = vadd.f32 %v51, %v161
    %v163 = vpop.f32.mrb[0].mxu0
    %v164 = vadd.f32 %v51, %v163
    %165 = vmatprep.mubr.f32.mxu0 0.0
    %166 = vmatmul.mubr.f32.gmra.mrb[0].mxu0 %v71
    %v167 = vpop.f32.mrb[0].mxu0
    %v168 = vadd.f32 %v56, %v167
    %v169 = vpop.f32.mrb[0].mxu0
    %v170 = vadd.f32 %v56, %v169
    %171 = vmatprep.mubr.f32.mxu0 0.0
    %172 = vmatmul.mubr.f32.gmra.mrb[0].mxu0 %v74
    %v173 = vpop.f32.mrb[0].mxu0
    %v174 = vadd.f32 %v61, %v173
    %v175 = vpop.f32.mrb[0].mxu0
    %v176 = vadd.f32 %v61, %v175
    %177 = vdwg.mxu0
    %178 = vmatprep.subr.mxu0 %v30
    %179 = vmatpush1.msra.mxu0 %v29
    %180 = vmatprep.subr.mxu0 %v87
    %181 = vmatpush1.msra.mxu0 %v84
    %182 = vmatprep.subr.mxu0 0.0
    %183 = vmatpush1.msra.mxu0 0.0
    %184 = vmatprep.subr.mxu0 0.0
    %185 = vmatpush1.msra.mxu0 0.0
    %186 = vmatprep.subr.mxu0 0.0
    %187 = vmatpush1.msra.mxu0 0.0
    %188 = vmatprep.subr.mxu0 0.0
    %189 = vmatpush1.msra.mxu0 0.0
    %190 = vmatprep.subr.mxu0 0.0
    %191 = vmatpush1.msra.mxu0 0.0
    %192 = vmatprep.subr.mxu0 0.0
    %193 = vmatpush1.msra.mxu0 0.0
    %194 = vmatprep.subr.mxu0 0.0
    %195 = vmatpush1.msra.mxu0 0.0
    %196 = vmatprep.subr.mxu0 0.0
    %197 = vmatpush1.msra.mxu0 0.0
    %198 = vmatprep.subr.mxu0 0.0
    %199 = vmatpush1.msra.mxu0 0.0
    %200 = vmatprep.subr.mxu0 0.0
    %201 = vmatpush1.msra.mxu0 0.0
    %202 = vmatprep.subr.mxu0 0.0
    %203 = vmatpush1.msra.mxu0 0.0
    %204 = vmatprep.subr.mxu0 0.0
    %205 = vmatpush1.msra.mxu0 0.0
    %206 = vmatprep.subr.mxu0 0.0
    %207 = vmatpush1.msra.mxu0 0.0
    %208 = vmatprep.subr.mxu0 0.0
    %209 = vmatpush1.msra.mxu0 0.0
    %210 = vmatprep.subr.mxu0 0.0
    %211 = vmatpush1.msra.mxu0 0.0
    %212 = vmatprep.subr.mxu0 0.0
    %213 = vmatpush1.msra.mxu0 0.0
    %214 = vmatprep.subr.mxu0 0.0
    %215 = vmatpush1.msra.mxu0 0.0
    %216 = vmatprep.subr.mxu0 0.0
    %217 = vmatpush1.msra.mxu0 0.0
    %218 = vmatprep.subr.mxu0 0.0
    %219 = vmatpush1.msra.mxu0 0.0
    %220 = vmatprep.subr.mxu0 0.0
    %221 = vmatpush1.msra.mxu0 0.0
    %222 = vmatprep.subr.mxu0 0.0
    %223 = vmatpush1.msra.mxu0 0.0
    %224 = vmatprep.subr.mxu0 0.0
    %225 = vmatpush1.msra.mxu0 0.0
    %226 = vmatprep.subr.mxu0 0.0
    %227 = vmatpush1.msra.mxu0 0.0
    %228 = vmatprep.subr.mxu0 0.0
    %229 = vmatpush1.msra.mxu0 0.0
    %230 = vmatprep.subr.mxu0 0.0
    %231 = vmatpush1.msra.mxu0 0.0
    %232 = vmatprep.subr.mxu0 0.0
    %233 = vmatpush1.msra.mxu0 0.0
    %234 = vmatprep.subr.mxu0 0.0
    %235 = vmatpush1.msra.mxu0 0.0
    %236 = vmatprep.subr.mxu0 0.0
    %237 = vmatpush1.msra.mxu0 0.0
    %238 = vmatprep.subr.mxu0 0.0
    %239 = vmatpush1.msra.mxu0 0.0
    %240 = vmatprep.subr.mxu0 0.0
    %241 = vmatpush1.msra.mxu0 0.0
    %242 = vmatprep.mubr.f32.mxu0 0.0
    %243 = vmatmul.mubr.f32.gmra.mrb[0].mxu0 %v65
    %v244 = vpop.f32.mrb[0].mxu0
    %v245 = vadd.f32 %v46, %v244
    %v246 = vpop.f32.mrb[0].mxu0
    %v247 = vadd.f32 %v46, %v246
    %248 = vmatprep.mubr.f32.mxu0 0.0
    %249 = vmatmul.mubr.f32.gmra.mrb[0].mxu0 %v68
    %v250 = vpop.f32.mrb[0].mxu0
    %v251 = vadd.f32 %v51, %v250
    %v252 = vpop.f32.mrb[0].mxu0
    %v253 = vadd.f32 %v51, %v252
    %254 = vmatprep.mubr.f32.mxu0 0.0
    %255 = vmatmul.mubr.f32.gmra.mrb[0].mxu0 %v71
    %v256 = vpop.f32.mrb[0].mxu0
    %v257 = vadd.f32 %v56, %v256
    %v258 = vpop.f32.mrb[0].mxu0
    %v259 = vadd.f32 %v56, %v258
    %260 = vmatprep.mubr.f32.mxu0 0.0
    %261 = vmatmul.mubr.f32.gmra.mrb[0].mxu0 %v74
    %v262 = vpop.f32.mrb[0].mxu0
    %v263 = vadd.f32 %v61, %v262
    %v264 = vpop.f32.mrb[0].mxu0
    %v265 = vadd.f32 %v61, %v264
    %266 = vdwg.mxu0
    %v267 = vmul.f32 %v156, 0.5
    %v268 = vmul.f32 %v158, 0.5
    %v269 = vmul.f32 %v245, 0.5
    %v270 = vmul.f32 %v247, 0.5
    %v271 = vmul.f32 %v162, 0.5
    %v272 = vmul.f32 %v164, 0.5
    %v273 = vmul.f32 %v251, 0.5
    %v274 = vmul.f32 %v253, 0.5
    %v275 = vmul.f32 %v168, 0.5
    %v276 = vmul.f32 %v170, 0.5
    %v277 = vmul.f32 %v257, 0.5
    %v278 = vmul.f32 %v259, 0.5
    %v279 = vmul.f32 %v174, 0.5
    %v280 = vmul.f32 %v176, 0.5
    %v281 = vmul.f32 %v263, 0.5
    %v282 = vmul.f32 %v265, 0.5
    %v283 = vmul.f32 %v156, 0.70710677
    %v284 = vmul.f32 %v158, 0.70710677
    %v285 = vmul.f32 %v245, 0.70710677
    %v286 = vmul.f32 %v247, 0.70710677
    %v287 = vmul.f32 %v162, 0.70710677
    %v288 = vmul.f32 %v164, 0.70710677
    %v289 = vmul.f32 %v251, 0.70710677
    %v290 = vmul.f32 %v253, 0.70710677
    %v291 = vmul.f32 %v168, 0.70710677
    %v292 = vmul.f32 %v170, 0.70710677
    %v293 = vmul.f32 %v257, 0.70710677
    %v294 = vmul.f32 %v259, 0.70710677
    %v295 = vmul.f32 %v174, 0.70710677
    %v296 = vmul.f32 %v176, 0.70710677
    %v297 = vmul.f32 %v263, 0.70710677
    %v298 = vmul.f32 %v265, 0.70710677
    %v299 = verf.f32.pop %v283
    %v300 = verf.f32.pop %v284
    %v301 = verf.f32.pop %v285
    %v302 = verf.f32.pop %v286
    %v303 = verf.f32.pop %v287
    %v304 = verf.f32.pop %v288
    %v305 = verf.f32.pop %v289
    %v306 = verf.f32.pop %v290
    %v307 = verf.f32.pop %v291
    %v308 = verf.f32.pop %v292
    %v309 = verf.f32.pop %v293
    %v310 = verf.f32.pop %v294
    %v311 = verf.f32.pop %v295
    %v312 = verf.f32.pop %v296
    %v313 = verf.f32.pop %v297
    %v314 = verf.f32.pop %v298
    %v315 = vadd.f32 %v299, 1.0
    %v316 = vadd.f32 %v300, 1.0
    %v317 = vadd.f32 %v301, 1.0
    %v318 = vadd.f32 %v302, 1.0
    %v319 = vadd.f32 %v303, 1.0
    %v320 = vadd.f32 %v304, 1.0
    %v321 = vadd.f32 %v305, 1.0
    %v322 = vadd.f32 %v306, 1.0
    %v323 = vadd.f32 %v307, 1.0
    %v324 = vadd.f32 %v308, 1.0
    %v325 = vadd.f32 %v309, 1.0
    %v326 = vadd.f32 %v310, 1.0
    %v327 = vadd.f32 %v311, 1.0
    %v328 = vadd.f32 %v312, 1.0
    %v329 = vadd.f32 %v313, 1.0
    %v330 = vadd.f32 %v314, 1.0
    %v331 = vmul.f32 %v267, %v315
    %v332 = vmul.f32 %v268, %v316
    %v333 = vmul.f32 %v269, %v317
    %v334 = vmul.f32 %v270, %v318
    %v335 = vmul.f32 %v271, %v319
    %v336 = vmul.f32 %v272, %v320
    %v337 = vmul.f32 %v273, %v321
    %v338 = vmul.f32 %v274, %v322
    %v339 = vmul.f32 %v275, %v323
    %v340 = vmul.f32 %v276, %v324
    %v341 = vmul.f32 %v277, %v325
    %v342 = vmul.f32 %v278, %v326
    %v343 = vmul.f32 %v279, %v327
    %v344 = vmul.f32 %v280, %v328
    %v345 = vmul.f32 %v281, %v329
    %v346 = vmul.f32 %v282, %v330
    %v347 = vld [vmem:[%s3] sm:$0xff]
    %v348 = vld [vmem:[%s3 + $0x8] sm:$0xff]
    %v349 = vld [vmem:[%s4] sm:$0xff]
    %v350 = vld [vmem:[%s4 + $0x8] sm:$0xff]
    %352 = vset.pattern.permute.xlu0 0
    %353 = vperm.xlu0 %352, %v349
    %v354 = vpop.permute.xlu0 %353
    %357 = vset.pattern.permute.xlu0 0
    %358 = vperm.xlu0 %357, %v350
    %v359 = vpop.permute.xlu0 %358
    %vm361 = vcmask 261120
    %v363 = vsel %vm361, %v347, 0
    %v366 = vsel %vm361, %v348, 0
    %368 = vmatprep.subr.mxu0 %v332
    %369 = vmatpush1.msra.mxu0 %v331
    %370 = vmatprep.subr.mxu0 %v336
    %371 = vmatpush1.msra.mxu0 %v335
    %372 = vmatprep.subr.mxu0 %v340
    %373 = vmatpush1.msra.mxu0 %v339
    %374 = vmatprep.subr.mxu0 %v344
    %375 = vmatpush1.msra.mxu0 %v343
    %376 = vmatprep.subr.mxu0 0.0
    %377 = vmatpush1.msra.mxu0 0.0
    %378 = vmatprep.subr.mxu0 0.0
    %379 = vmatpush1.msra.mxu0 0.0
    %380 = vmatprep.subr.mxu0 0.0
    %381 = vmatpush1.msra.mxu0 0.0
    %382 = vmatprep.subr.mxu0 0.0
    %383 = vmatpush1.msra.mxu0 0.0
    %384 = vmatprep.subr.mxu0 0.0
    %385 = vmatpush1.msra.mxu0 0.0
    %386 = vmatprep.subr.mxu0 0.0
    %387 = vmatpush1.msra.mxu0 0.0
    %388 = vmatprep.subr.mxu0 0.0
    %389 = vmatpush1.msra.mxu0 0.0
    %390 = vmatprep.subr.mxu0 0.0
    %391 = vmatpush1.msra.mxu0 0.0
    %392 = vmatprep.subr.mxu0 0.0
    %393 = vmatpush1.msra.mxu0 0.0
    %394 = vmatprep.subr.mxu0 0.0
    %395 = vmatpush1.msra.mxu0 0.0
    %396 = vmatprep.subr.mxu0 0.0
    %397 = vmatpush1.msra.mxu0 0.0
    %398 = vmatprep.subr.mxu0 0.0
    %399 = vmatpush1.msra.mxu0 0.0
    %400 = vmatprep.subr.mxu0 0.0
    %401 = vmatpush1.msra.mxu0 0.0
    %402 = vmatprep.subr.mxu0 0.0
    %403 = vmatpush1.msra.mxu0 0.0
    %404 = vmatprep.subr.mxu0 0.0
    %405 = vmatpush1.msra.mxu0 0.0
    %406 = vmatprep.subr.mxu0 0.0
    %407 = vmatpush1.msra.mxu0 0.0
    %408 = vmatprep.subr.mxu0 0.0
    %409 = vmatpush1.msra.mxu0 0.0
    %410 = vmatprep.subr.mxu0 0.0
    %411 = vmatpush1.msra.mxu0 0.0
    %412 = vmatprep.subr.mxu0 0.0
    %413 = vmatpush1.msra.mxu0 0.0
    %414 = vmatprep.subr.mxu0 0.0
    %415 = vmatpush1.msra.mxu0 0.0
    %416 = vmatprep.subr.mxu0 0.0
    %417 = vmatpush1.msra.mxu0 0.0
    %418 = vmatprep.subr.mxu0 0.0
    %419 = vmatpush1.msra.mxu0 0.0
    %420 = vmatprep.subr.mxu0 0.0
    %421 = vmatpush1.msra.mxu0 0.0
    %422 = vmatprep.subr.mxu0 0.0
    %423 = vmatpush1.msra.mxu0 0.0
    %424 = vmatprep.subr.mxu0 0.0
    %425 = vmatpush1.msra.mxu0 0.0
    %426 = vmatprep.subr.mxu0 0.0
    %427 = vmatpush1.msra.mxu0 0.0
    %428 = vmatprep.subr.mxu0 0.0
    %429 = vmatpush1.msra.mxu0 0.0
    %430 = vmatprep.subr.mxu0 0.0
    %431 = vmatpush1.msra.mxu0 0.0
    %432 = vmatprep.mubr.f32.mxu0 0.0
    %433 = vmatmul.mubr.f32.gmra.mrb[0].mxu0 %v363
    %v434 = vpop.f32.mrb[0].mxu0
    %v435 = vadd.f32 %v354, %v434
    %v436 = vpop.f32.mrb[0].mxu0
    %v437 = vadd.f32 %v354, %v436
    %438 = vmatprep.mubr.f32.mxu0 0.0
    %439 = vmatmul.mubr.f32.gmra.mrb[0].mxu0 %v366
    %v440 = vpop.f32.mrb[0].mxu0
    %v441 = vadd.f32 %v359, %v440
    %v442 = vpop.f32.mrb[0].mxu0
    %v443 = vadd.f32 %v359, %v442
    %444 = vdwg.mxu0
    %445 = vmatprep.subr.mxu0 %v334
    %446 = vmatpush1.msra.mxu0 %v333
    %447 = vmatprep.subr.mxu0 %v338
    %448 = vmatpush1.msra.mxu0 %v337
    %449 = vmatprep.subr.mxu0 %v342
    %450 = vmatpush1.msra.mxu0 %v341
    %451 = vmatprep.subr.mxu0 %v346
    %452 = vmatpush1.msra.mxu0 %v345
    %453 = vmatprep.subr.mxu0 0.0
    %454 = vmatpush1.msra.mxu0 0.0
    %455 = vmatprep.subr.mxu0 0.0
    %456 = vmatpush1.msra.mxu0 0.0
    %457 = vmatprep.subr.mxu0 0.0
    %458 = vmatpush1.msra.mxu0 0.0
    %459 = vmatprep.subr.mxu0 0.0
    %460 = vmatpush1.msra.mxu0 0.0
    %461 = vmatprep.subr.mxu0 0.0
    %462 = vmatpush1.msra.mxu0 0.0
    %463 = vmatprep.subr.mxu0 0.0
    %464 = vmatpush1.msra.mxu0 0.0
    %465 = vmatprep.subr.mxu0 0.0
    %466 = vmatpush1.msra.mxu0 0.0
    %467 = vmatprep.subr.mxu0 0.0
    %468 = vmatpush1.msra.mxu0 0.0
    %469 = vmatprep.subr.mxu0 0.0
    %470 = vmatpush1.msra.mxu0 0.0
    %471 = vmatprep.subr.mxu0 0.0
    %472 = vmatpush1.msra.mxu0 0.0
    %473 = vmatprep.subr.mxu0 0.0
    %474 = vmatpush1.msra.mxu0 0.0
    %475 = vmatprep.subr.mxu0 0.0
    %476 = vmatpush1.msra.mxu0 0.0
    %477 = vmatprep.subr.mxu0 0.0
    %478 = vmatpush1.msra.mxu0 0.0
    %479 = vmatprep.subr.mxu0 0.0
    %480 = vmatpush1.msra.mxu0 0.0
    %481 = vmatprep.subr.mxu0 0.0
    %482 = vmatpush1.msra.mxu0 0.0
    %483 = vmatprep.subr.mxu0 0.0
    %484 = vmatpush1.msra.mxu0 0.0
    %485 = vmatprep.subr.mxu0 0.0
    %486 = vmatpush1.msra.mxu0 0.0
    %487 = vmatprep.subr.mxu0 0.0
    %488 = vmatpush1.msra.mxu0 0.0
    %489 = vmatprep.subr.mxu0 0.0
    %490 = vmatpush1.msra.mxu0 0.0
    %491 = vmatprep.subr.mxu0 0.0
    %492 = vmatpush1.msra.mxu0 0.0
    %493 = vmatprep.subr.mxu0 0.0
    %494 = vmatpush1.msra.mxu0 0.0
    %495 = vmatprep.subr.mxu0 0.0
    %496 = vmatpush1.msra.mxu0 0.0
    %497 = vmatprep.subr.mxu0 0.0
    %498 = vmatpush1.msra.mxu0 0.0
    %499 = vmatprep.subr.mxu0 0.0
    %500 = vmatpush1.msra.mxu0 0.0
    %501 = vmatprep.subr.mxu0 0.0
    %502 = vmatpush1.msra.mxu0 0.0
    %503 = vmatprep.subr.mxu0 0.0
    %504 = vmatpush1.msra.mxu0 0.0
    %505 = vmatprep.subr.mxu0 0.0
    %506 = vmatpush1.msra.mxu0 0.0
    %507 = vmatprep.subr.mxu0 0.0
    %508 = vmatpush1.msra.mxu0 0.0
    %509 = vmatprep.mubr.f32.mxu0 0.0
    %510 = vmatmul.mubr.f32.gmra.mrb[0].mxu0 %v363
    %v511 = vpop.f32.mrb[0].mxu0
    %v512 = vadd.f32 %v354, %v511
    %v513 = vpop.f32.mrb[0].mxu0
    %v514 = vadd.f32 %v354, %v513
    %515 = vmatprep.mubr.f32.mxu0 0.0
    %516 = vmatmul.mubr.f32.gmra.mrb[0].mxu0 %v366
    %v517 = vpop.f32.mrb[0].mxu0
    %v518 = vadd.f32 %v359, %v517
    %v519 = vpop.f32.mrb[0].mxu0
    %v520 = vadd.f32 %v359, %v519
    %521 = vdwg.mxu0
    %v522 = vmul.f32 %v435, 0.5
    %v523 = vmul.f32 %v437, 0.5
    %v524 = vmul.f32 %v512, 0.5
    %v525 = vmul.f32 %v514, 0.5
    %v526 = vmul.f32 %v441, 0.5
    %v527 = vmul.f32 %v443, 0.5
    %v528 = vmul.f32 %v518, 0.5
    %v529 = vmul.f32 %v520, 0.5
    %v530 = vmul.f32 %v435, 0.70710677
    %v531 = vmul.f32 %v437, 0.70710677
    %v532 = vmul.f32 %v512, 0.70710677
    %v533 = vmul.f32 %v514, 0.70710677
    %v534 = vmul.f32 %v441, 0.70710677
    %v535 = vmul.f32 %v443, 0.70710677
    %v536 = vmul.f32 %v518, 0.70710677
    %v537 = vmul.f32 %v520, 0.70710677
    %v538 = verf.f32.pop %v530
    %v539 = verf.f32.pop %v531
    %v540 = verf.f32.pop %v532
    %v541 = verf.f32.pop %v533
    %v542 = verf.f32.pop %v534
    %v543 = verf.f32.pop %v535
    %v544 = verf.f32.pop %v536
    %v545 = verf.f32.pop %v537
    %v546 = vadd.f32 %v538, 1.0
    %v547 = vadd.f32 %v539, 1.0
    %v548 = vadd.f32 %v540, 1.0
    %v549 = vadd.f32 %v541, 1.0
    %v550 = vadd.f32 %v542, 1.0
    %v551 = vadd.f32 %v543, 1.0
    %v552 = vadd.f32 %v544, 1.0
    %v553 = vadd.f32 %v545, 1.0
    %v554 = vmul.f32 %v522, %v546
    %v555 = vmul.f32 %v523, %v547
    %v556 = vmul.f32 %v524, %v548
    %v557 = vmul.f32 %v525, %v549
    %v558 = vmul.f32 %v526, %v550
    %v559 = vmul.f32 %v527, %v551
    %v560 = vmul.f32 %v528, %v552
    %v561 = vmul.f32 %v529, %v553
    %v562 = vld [vmem:[%s5] sm:$0xff]
    %v563 = vld [vmem:[%s6] sm:$0xff]
    %565 = vset.pattern.permute.xlu0 0
    %566 = vperm.xlu0 %565, %v563
    %v567 = vpop.permute.xlu0 %566
    %vm569 = vcmask 130048
    %v571 = vsel %vm569, %v562, 0
    %573 = vmatprep.subr.mxu0 %v555
    %574 = vmatpush1.msra.mxu0 %v554
    %575 = vmatprep.subr.mxu0 %v559
    %576 = vmatpush1.msra.mxu0 %v558
    %577 = vmatprep.subr.mxu0 0.0
    %578 = vmatpush1.msra.mxu0 0.0
    %579 = vmatprep.subr.mxu0 0.0
    %580 = vmatpush1.msra.mxu0 0.0
    %581 = vmatprep.subr.mxu0 0.0
    %582 = vmatpush1.msra.mxu0 0.0
    %583 = vmatprep.subr.mxu0 0.0
    %584 = vmatpush1.msra.mxu0 0.0
    %585 = vmatprep.subr.mxu0 0.0
    %586 = vmatpush1.msra.mxu0 0.0
    %587 = vmatprep.subr.mxu0 0.0
    %588 = vmatpush1.msra.mxu0 0.0
    %589 = vmatprep.subr.mxu0 0.0
    %590 = vmatpush1.msra.mxu0 0.0
    %591 = vmatprep.subr.mxu0 0.0
    %592 = vmatpush1.msra.mxu0 0.0
    %593 = vmatprep.subr.mxu0 0.0
    %594 = vmatpush1.msra.mxu0 0.0
    %595 = vmatprep.subr.mxu0 0.0
    %596 = vmatpush1.msra.mxu0 0.0
    %597 = vmatprep.subr.mxu0 0.0
    %598 = vmatpush1.msra.mxu0 0.0
    %599 = vmatprep.subr.mxu0 0.0
    %600 = vmatpush1.msra.mxu0 0.0
    %601 = vmatprep.subr.mxu0 0.0
    %602 = vmatpush1.msra.mxu0 0.0
    %603 = vmatprep.subr.mxu0 0.0
    %604 = vmatpush1.msra.mxu0 0.0
    %605 = vmatprep.subr.mxu0 0.0
    %606 = vmatpush1.msra.mxu0 0.0
    %607 = vmatprep.subr.mxu0 0.0
    %608 = vmatpush1.msra.mxu0 0.0
    %609 = vmatprep.subr.mxu0 0.0
    %610 = vmatpush1.msra.mxu0 0.0
    %611 = vmatprep.subr.mxu0 0.0
    %612 = vmatpush1.msra.mxu0 0.0
    %613 = vmatprep.subr.mxu0 0.0
    %614 = vmatpush1.msra.mxu0 0.0
    %615 = vmatprep.subr.mxu0 0.0
    %616 = vmatpush1.msra.mxu0 0.0
    %617 = vmatprep.subr.mxu0 0.0
    %618 = vmatpush1.msra.mxu0 0.0
    %619 = vmatprep.subr.mxu0 0.0
    %620 = vmatpush1.msra.mxu0 0.0
    %621 = vmatprep.subr.mxu0 0.0
    %622 = vmatpush1.msra.mxu0 0.0
    %623 = vmatprep.subr.mxu0 0.0
    %624 = vmatpush1.msra.mxu0 0.0
    %625 = vmatprep.subr.mxu0 0.0
    %626 = vmatpush1.msra.mxu0 0.0
    %627 = vmatprep.subr.mxu0 0.0
    %628 = vmatpush1.msra.mxu0 0.0
    %629 = vmatprep.subr.mxu0 0.0
    %630 = vmatpush1.msra.mxu0 0.0
    %631 = vmatprep.subr.mxu0 0.0
    %632 = vmatpush1.msra.mxu0 0.0
    %633 = vmatprep.subr.mxu0 0.0
    %634 = vmatpush1.msra.mxu0 0.0
    %635 = vmatprep.subr.mxu0 0.0
    %636 = vmatpush1.msra.mxu0 0.0
    %637 = vmatprep.mubr.f32.mxu0 0.0
    %638 = vmatmul.mubr.f32.gmra.mrb[0].mxu0 %v571
    %v639 = vpop.f32.mrb[0].mxu0
    %v640 = vadd.f32 %v567, %v639
    %v641 = vpop.f32.mrb[0].mxu0
    %v642 = vadd.f32 %v567, %v641
    %643 = vdwg.mxu0
    %644 = vmatprep.subr.mxu0 %v557
    %645 = vmatpush1.msra.mxu0 %v556
    %646 = vmatprep.subr.mxu0 %v561
    %647 = vmatpush1.msra.mxu0 %v560
    %648 = vmatprep.subr.mxu0 0.0
    %649 = vmatpush1.msra.mxu0 0.0
    %650 = vmatprep.subr.mxu0 0.0
    %651 = vmatpush1.msra.mxu0 0.0
    %652 = vmatprep.subr.mxu0 0.0
    %653 = vmatpush1.msra.mxu0 0.0
    %654 = vmatprep.subr.mxu0 0.0
    %655 = vmatpush1.msra.mxu0 0.0
    %656 = vmatprep.subr.mxu0 0.0
    %657 = vmatpush1.msra.mxu0 0.0
    %658 = vmatprep.subr.mxu0 0.0
    %659 = vmatpush1.msra.mxu0 0.0
    %660 = vmatprep.subr.mxu0 0.0
    %661 = vmatpush1.msra.mxu0 0.0
    %662 = vmatprep.subr.mxu0 0.0
    %663 = vmatpush1.msra.mxu0 0.0
    %664 = vmatprep.subr.mxu0 0.0
    %665 = vmatpush1.msra.mxu0 0.0
    %666 = vmatprep.subr.mxu0 0.0
    %667 = vmatpush1.msra.mxu0 0.0
    %668 = vmatprep.subr.mxu0 0.0
    %669 = vmatpush1.msra.mxu0 0.0
    %670 = vmatprep.subr.mxu0 0.0
    %671 = vmatpush1.msra.mxu0 0.0
    %672 = vmatprep.subr.mxu0 0.0
    %673 = vmatpush1.msra.mxu0 0.0
    %674 = vmatprep.subr.mxu0 0.0
    %675 = vmatpush1.msra.mxu0 0.0
    %676 = vmatprep.subr.mxu0 0.0
    %677 = vmatpush1.msra.mxu0 0.0
    %678 = vmatprep.subr.mxu0 0.0
    %679 = vmatpush1.msra.mxu0 0.0
    %680 = vmatprep.subr.mxu0 0.0
    %681 = vmatpush1.msra.mxu0 0.0
    %682 = vmatprep.subr.mxu0 0.0
    %683 = vmatpush1.msra.mxu0 0.0
    %684 = vmatprep.subr.mxu0 0.0
    %685 = vmatpush1.msra.mxu0 0.0
    %686 = vmatprep.subr.mxu0 0.0
    %687 = vmatpush1.msra.mxu0 0.0
    %688 = vmatprep.subr.mxu0 0.0
    %689 = vmatpush1.msra.mxu0 0.0
    %690 = vmatprep.subr.mxu0 0.0
    %691 = vmatpush1.msra.mxu0 0.0
    %692 = vmatprep.subr.mxu0 0.0
    %693 = vmatpush1.msra.mxu0 0.0
    %694 = vmatprep.subr.mxu0 0.0
    %695 = vmatpush1.msra.mxu0 0.0
    %696 = vmatprep.subr.mxu0 0.0
    %697 = vmatpush1.msra.mxu0 0.0
    %698 = vmatprep.subr.mxu0 0.0
    %699 = vmatpush1.msra.mxu0 0.0
    %700 = vmatprep.subr.mxu0 0.0
    %701 = vmatpush1.msra.mxu0 0.0
    %702 = vmatprep.subr.mxu0 0.0
    %703 = vmatpush1.msra.mxu0 0.0
    %704 = vmatprep.subr.mxu0 0.0
    %705 = vmatpush1.msra.mxu0 0.0
    %706 = vmatprep.subr.mxu0 0.0
    %707 = vmatpush1.msra.mxu0 0.0
    %708 = vmatprep.mubr.f32.mxu0 0.0
    %709 = vmatmul.mubr.f32.gmra.mrb[0].mxu0 %v571
    %v710 = vpop.f32.mrb[0].mxu0
    %v711 = vadd.f32 %v567, %v710
    %v712 = vpop.f32.mrb[0].mxu0
    %v713 = vadd.f32 %v567, %v712
    %714 = vdwg.mxu0
    %715 = vst [vmem:[#allocation2] sm:$0xff] %v640
    %716 = vst [vmem:[#allocation2 + $0x8] sm:$0xff] %v642
    %717 = vst [vmem:[#allocation2 + $0x10] sm:$0xff] %v711
    %718 = vst [vmem:[#allocation2 + $0x18] sm:$0xff] %v713
    // Predicated region
    $region30: #{tpu_custom_call.1} parent=1 // pred_check
      _
    $region31: #{tpu_custom_call.1} parent=1 // pred_check_branch
      %720 = sbr.rel (0) target = $region33
    $region32: #{tpu_custom_call.1} parent=1 // pred_region
      %s722 = ssub.s32 512, 512
      %723 = vsyncadd [#allocation3], %s722
      %s725 = sshll.u32 [#allocation2], 4
      %s726 = int_to_ptr.vmem [resolvable:$true] %s725
      %728 = dma.vmem_to_hbm [thread:$0]  %s726, 512, %s7, [#allocation3]
    $region33: #{tpu_custom_call.1} parent=1 // pred_fallthru
      _
    // Predicated region
    $region34: #{tpu_custom_call.1} parent=1 // pred_check
      _
    $region35: #{tpu_custom_call.1} parent=1 // pred_check_branch
      %730 = sbr.rel (0) target = $region37
    $region36: #{tpu_custom_call.1} parent=1 // pred_region
      %731 = dma.done [#allocation3], 512
    $region37: #{tpu_custom_call.1} parent=1 // pred_fallthru
      _
    %732 = vsyncpa [#allocation3], 1

</llo_original>
